<compile_context>
chip_gen: v6e
topology: v6e:2x2x1
jax: 0.10.0
libtpu: 0.0.40
codegen_flags: <defaults>
</compile_context>

<pallas_src>
import jax
import jax.numpy as jnp
from jax import lax
from jax.experimental import pallas as pl
from jax.experimental.pallas import tpu as pltpu

# ----------------------------- config ---------------------------------------
N_NODE = 27            # n_node (module's shortcut BatchNorm1d(27) implies 27)
N_PAD = 32             # padded node count (sublane-friendly, multiple of 8)
B = 2                  # batch
INPUT_DIM = 16         # args.input_dim
C_PAD = 32             # padded input-channel width (== HIDDEN_DIM)
HIDDEN_DIM = 32        # args.hidden_dim = [32, 32]
OUTPUT_DIM = 32        # args.output_dim
BN_EPS = 1e-5          # nn.BatchNorm1d default
# args: num_hidden_blocks=2, num_hidden_layers=2, activation='ReLU', bn=True,
#       is_residual=False, dropout irrelevant in eval.


# --------------------------------- kernel -----------------------------------
def gcn_kernel(x_ref, m_ref, w_ref, bn_ref, o_ref):
    """Whole forward on a (B*N_PAD, C) slab.

    x_ref : (B*N_PAD, C_PAD)  f32   padded node features, batch folded into rows
    m_ref : (B*N_PAD, B*N_PAD) f32  block-diagonal (A + I), precomputed host-side
    w_ref : (4, 32, 32)        f32  packed per-layer weights (in,out layout)
    bn_ref: (2, B*N_PAD, 1)    f32  fused BatchNorm scale / shift per row
    o_ref : (B*N_PAD, OUTPUT_DIM) f32
    """
    M = m_ref[...]                       # loaded once, reused by all 4 layers
    x = x_ref[...]

    def gcn_layer(x, li):
        # GCNLayer = (A + I) @ relu(x @ W^T); batch handled by block-diag M.
        y = jnp.dot(x, w_ref[li], preferred_element_type=jnp.float32)
        y = jnp.maximum(y, 0.0)          # self.act = ReLU
        return jnp.dot(M, y, preferred_element_type=jnp.float32)

    # TODO(synk): F.dropout(p=args.dropout) not implemented — eval-mode forward,
    # dropout is the identity.

    # blocks[0] : GCNBlock(2 layers, INPUT_DIM -> HIDDEN_DIM)
    x = gcn_layer(x, 0)
    x = gcn_layer(x, 1)

    # bns[0] : BatchNorm1d(n_node), eval mode, fused to scale/shift host-side.
    x = x * bn_ref[0] + bn_ref[1]

    # blocks[-1] : final GCNBlock(2 layers, HIDDEN_DIM -> OUTPUT_DIM)
    # (blocks[1] exists in the PyTorch module but its forward skips it — reproduced.)
    x = gcn_layer(x, 2)
    x = gcn_layer(x, 3)

    o_ref[...] = x


# ------------------------------ params --------------------------------------
def make_params(key, batch=B):
    ks = jax.random.split(key, 4)
    gain = 2.0 ** 0.5                                   # calculate_gain('relu')

    def xavier_t(k, fan_in, fan_out):
        # nn.init.xavier_uniform_ on the (out,in) Linear weight, stored (in,out).
        lim = gain * (6.0 / (fan_in + fan_out)) ** 0.5
        return jax.random.uniform(k, (fan_in, fan_out), jnp.float32, -lim, lim)

    w00 = xavier_t(ks[0], INPUT_DIM, HIDDEN_DIM)        # blocks[0].layers[0]
    w01 = xavier_t(ks[1], HIDDEN_DIM, HIDDEN_DIM)       # blocks[0].layers[1]
    w10 = xavier_t(ks[2], HIDDEN_DIM, HIDDEN_DIM)       # blocks[-1].layers[0]
    w11 = xavier_t(ks[3], HIDDEN_DIM, OUTPUT_DIM)       # blocks[-1].layers[1]

    # Pack the 4 weights into one buffer; zero-pad w00's input rows to C_PAD
    # (the matching x channels are zero-padded, so the math is unchanged).
    w00_pad = jnp.zeros((C_PAD, HIDDEN_DIM), jnp.float32).at[:INPUT_DIM].set(w00)
    w_packed = jnp.stack([w00_pad, w01, w10, w11], axis=0)        # (4, 32, 32)

    # Adjacency preprocessing done ONCE here:  M = sigmoid(adj * (1-I)) + I,
    # zero-padded to N_PAD and laid out block-diagonally over the batch.
    adj = jnp.full((N_NODE, N_NODE), 1.0 / N_NODE, jnp.float32)
    eye = jnp.eye(N_NODE, dtype=jnp.float32)
    M27 = jax.nn.sigmoid(adj * (1.0 - eye)) + eye
    M_pad = jnp.zeros((N_PAD, N_PAD), jnp.float32).at[:N_NODE, :N_NODE].set(M27)
    M_bd = jnp.kron(jnp.eye(batch, dtype=jnp.float32), M_pad)     # (B*N_PAD, B*N_PAD)

    # BatchNorm1d(n_node) fresh-module eval buffers, fused into scale/shift.
    # TODO(synk): a trained checkpoint must load real running_mean/var/gamma/beta.
    bn_rm = jnp.zeros((N_NODE,), jnp.float32)
    bn_rv = jnp.ones((N_NODE,), jnp.float32)
    bn_g = jnp.ones((N_NODE,), jnp.float32)
    bn_b = jnp.zeros((N_NODE,), jnp.float32)
    scale = bn_g * lax.rsqrt(bn_rv + BN_EPS)
    shift = bn_b - bn_rm * scale
    scale_pad = jnp.zeros((N_PAD,), jnp.float32).at[:N_NODE].set(scale)
    shift_pad = jnp.zeros((N_PAD,), jnp.float32).at[:N_NODE].set(shift)
    bn = jnp.stack([scale_pad, shift_pad], axis=0)                # (2, N_PAD)
    bn = jnp.tile(bn, (1, batch))[:, :, None]                     # (2, B*N_PAD, 1)

    params = dict(m=M_bd, w=w_packed, bn=bn)
    ref = dict(M27=M27, w00=w00, w01=w01, w10=w10, w11=w11,
               scale=scale, shift=shift)
    return params, ref


# ------------------------------ wrapper --------------------------------------
@jax.jit
def node_prediction_gcn_forward(x, params):
    Bb, N, C = x.shape
    # Host-side layout prep: zero-pad nodes 27->32 and channels 16->32, fold
    # batch into rows so the kernel never reshapes.
    x_pad = jnp.pad(x, ((0, 0), (0, N_PAD - N), (0, C_PAD - C)))
    x2d = x_pad.reshape(Bb * N_PAD, C_PAD)

    args = [x2d, params['m'], params['w'], params['bn']]

    def full_spec(a):
        nd = a.ndim
        return pl.BlockSpec(a.shape, lambda i, _nd=nd: (0,) * _nd)

    out2d = pl.pallas_call(
        gcn_kernel,
        out_shape=jax.ShapeDtypeStruct((Bb * N_PAD, OUTPUT_DIM), jnp.float32),
        # Whole (tiny) problem in one grid step: latency-bound, everything VMEM
        # resident.  At real sizes: tile batch/nodes on a "parallel" axis
        # (v7x dual-TC), stream per-layer weights, 128-multiple dims.
        grid=(1,),
        in_specs=[full_spec(a) for a in args],
        out_specs=pl.BlockSpec((Bb * N_PAD, OUTPUT_DIM), lambda i: (0, 0)),
        compiler_params=pltpu.CompilerParams(
            dimension_semantics=("arbitrary",)),
    )(*args)

    # Drop node padding (pad rows are exactly zero: block-diag M has zero rows there).
    return out2d.reshape(Bb, N_PAD, OUTPUT_DIM)[:, :N, :]


# ------------------------- pure-JAX reference --------------------------------
def reference_forward(x, ref):
    M = ref['M27']

    def layer(x, w):
        y = jnp.maximum(jnp.einsum('bnc,cd->bnd', x, w), 0.0)
        return jnp.einsum('ij,bjd->bid', M, y)

    x = layer(x, ref['w00'])
    x = layer(x, ref['w01'])
    x = x * ref['scale'][None, :, None] + ref['shift'][None, :, None]
    x = layer(x, ref['w10'])
    x = layer(x, ref['w11'])
    return x


if __name__ == "__main__":
    key = jax.random.PRNGKey(0)
    pkey, xkey = jax.random.split(key)

    params, ref = make_params(pkey, batch=B)
    x = jax.random.normal(xkey, (B, N_NODE, INPUT_DIM), jnp.float32)

    out = node_prediction_gcn_forward(x, params)
    jax.block_until_ready(out)

    assert out.shape == (B, N_NODE, OUTPUT_DIM), out.shape
    assert out.dtype == jnp.float32
    assert bool(jnp.all(jnp.isfinite(out)))

    expected = reference_forward(x, ref)
    assert bool(jnp.allclose(out, expected, rtol=5e-2, atol=5e-2)), \
        float(jnp.max(jnp.abs(out - expected)))

    print("KERNEL_OK")
</pallas_src>

<mosaic_0001>
module attributes {stable_mosaic.version = 11 : i64} {
  func.func @gcn_kernel(%arg0: i32, %arg1: memref<64x32xf32, #tpu.memory_space<vmem>>, %arg2: memref<64x64xf32, #tpu.memory_space<vmem>>, %arg3: memref<4x32x32xf32, #tpu.memory_space<vmem>>, %arg4: memref<2x64x1xf32, #tpu.memory_space<vmem>>, %arg5: memref<64x32xf32, #tpu.memory_space<vmem>>) attributes {dimension_semantics = [#tpu.dimension_semantics<arbitrary>], iteration_bounds = array<i64: 1>, scalar_prefetch = 0 : i64, scratch_operands = 0 : i64, tpu.core_type = #tpu.core_type<tc>, window_params = [{pipeline_mode = #tpu.pipeline_mode<synchronous>, transform_indices = @transform_0, window_bounds = array<i64: 64, 32>}, {pipeline_mode = #tpu.pipeline_mode<synchronous>, transform_indices = @transform_1, window_bounds = array<i64: 64, 64>}, {pipeline_mode = #tpu.pipeline_mode<synchronous>, transform_indices = @transform_2, window_bounds = array<i64: 4, 32, 32>}, {pipeline_mode = #tpu.pipeline_mode<synchronous>, transform_indices = @transform_3, window_bounds = array<i64: 2, 64, 1>}, {pipeline_mode = #tpu.pipeline_mode<synchronous>, transform_indices = @transform_4, window_bounds = array<i64: 64, 32>}]} {
    %c0 = arith.constant 0 : index
    %c0_0 = arith.constant 0 : index
    %0 = vector.load %arg2[%c0, %c0_0] : memref<64x64xf32, #tpu.memory_space<vmem>>, vector<64x64xf32>
    %c0_1 = arith.constant 0 : index
    %c0_2 = arith.constant 0 : index
    %1 = vector.load %arg1[%c0_1, %c0_2] : memref<64x32xf32, #tpu.memory_space<vmem>>, vector<64x32xf32>
    %c0_3 = arith.constant 0 : index
    %c0_4 = arith.constant 0 : index
    %c0_5 = arith.constant 0 : index
    %2 = vector.load %arg3[%c0_3, %c0_4, %c0_5] : memref<4x32x32xf32, #tpu.memory_space<vmem>>, vector<1x32x32xf32>
    %3 = vector.shape_cast %2 : vector<1x32x32xf32> to vector<32x32xf32>
    %cst = arith.constant dense<0.000000e+00> : vector<64x32xf32>
    %4 = tpu.matmul %1, %3, %cst {dimension_numbers = #tpu.dot_dimension_numbers<[1], [0], [0], [1], [0, 0, 1, 1], [], []>} : vector<64x32xf32>, vector<32x32xf32>, vector<64x32xf32> -> vector<64x32xf32>
    %cst_6 = arith.constant 0.000000e+00 : f32
    %5 = vector.broadcast %cst_6 : f32 to vector<64x32xf32>
    %6 = arith.maximumf %4, %5 : vector<64x32xf32>
    %cst_7 = arith.constant dense<0.000000e+00> : vector<64x32xf32>
    %7 = tpu.matmul %0, %6, %cst_7 {dimension_numbers = #tpu.dot_dimension_numbers<[1], [0], [0], [1], [0, 0, 1, 1], [], []>} : vector<64x64xf32>, vector<64x32xf32>, vector<64x32xf32> -> vector<64x32xf32>
    %c1 = arith.constant 1 : index
    %c0_8 = arith.constant 0 : index
    %c0_9 = arith.constant 0 : index
    %8 = vector.load %arg3[%c1, %c0_8, %c0_9] : memref<4x32x32xf32, #tpu.memory_space<vmem>>, vector<1x32x32xf32>
    %9 = vector.shape_cast %8 : vector<1x32x32xf32> to vector<32x32xf32>
    %cst_10 = arith.constant dense<0.000000e+00> : vector<64x32xf32>
    %10 = tpu.matmul %7, %9, %cst_10 {dimension_numbers = #tpu.dot_dimension_numbers<[1], [0], [0], [1], [0, 0, 1, 1], [], []>} : vector<64x32xf32>, vector<32x32xf32>, vector<64x32xf32> -> vector<64x32xf32>
    %cst_11 = arith.constant 0.000000e+00 : f32
    %11 = vector.broadcast %cst_11 : f32 to vector<64x32xf32>
    %12 = arith.maximumf %10, %11 : vector<64x32xf32>
    %cst_12 = arith.constant dense<0.000000e+00> : vector<64x32xf32>
    %13 = tpu.matmul %0, %12, %cst_12 {dimension_numbers = #tpu.dot_dimension_numbers<[1], [0], [0], [1], [0, 0, 1, 1], [], []>} : vector<64x64xf32>, vector<64x32xf32>, vector<64x32xf32> -> vector<64x32xf32>
    %c0_13 = arith.constant 0 : index
    %c0_14 = arith.constant 0 : index
    %c0_15 = arith.constant 0 : index
    %14 = vector.load %arg4[%c0_13, %c0_14, %c0_15] : memref<2x64x1xf32, #tpu.memory_space<vmem>>, vector<1x64x1xf32>
    %15 = vector.shape_cast %14 : vector<1x64x1xf32> to vector<64x1xf32>
    %16 = vector.broadcast %15 : vector<64x1xf32> to vector<64x32xf32>
    %17 = arith.mulf %13, %16 : vector<64x32xf32>
    %c1_16 = arith.constant 1 : index
    %c0_17 = arith.constant 0 : index
    %c0_18 = arith.constant 0 : index
    %18 = vector.load %arg4[%c1_16, %c0_17, %c0_18] : memref<2x64x1xf32, #tpu.memory_space<vmem>>, vector<1x64x1xf32>
    %19 = vector.shape_cast %18 : vector<1x64x1xf32> to vector<64x1xf32>
    %20 = vector.broadcast %19 : vector<64x1xf32> to vector<64x32xf32>
    %21 = arith.addf %17, %20 : vector<64x32xf32>
    %c2 = arith.constant 2 : index
    %c0_19 = arith.constant 0 : index
    %c0_20 = arith.constant 0 : index
    %22 = vector.load %arg3[%c2, %c0_19, %c0_20] : memref<4x32x32xf32, #tpu.memory_space<vmem>>, vector<1x32x32xf32>
    %23 = vector.shape_cast %22 : vector<1x32x32xf32> to vector<32x32xf32>
    %cst_21 = arith.constant dense<0.000000e+00> : vector<64x32xf32>
    %24 = tpu.matmul %21, %23, %cst_21 {dimension_numbers = #tpu.dot_dimension_numbers<[1], [0], [0], [1], [0, 0, 1, 1], [], []>} : vector<64x32xf32>, vector<32x32xf32>, vector<64x32xf32> -> vector<64x32xf32>
    %cst_22 = arith.constant 0.000000e+00 : f32
    %25 = vector.broadcast %cst_22 : f32 to vector<64x32xf32>
    %26 = arith.maximumf %24, %25 : vector<64x32xf32>
    %cst_23 = arith.constant dense<0.000000e+00> : vector<64x32xf32>
    %27 = tpu.matmul %0, %26, %cst_23 {dimension_numbers = #tpu.dot_dimension_numbers<[1], [0], [0], [1], [0, 0, 1, 1], [], []>} : vector<64x64xf32>, vector<64x32xf32>, vector<64x32xf32> -> vector<64x32xf32>
    %c3 = arith.constant 3 : index
    %c0_24 = arith.constant 0 : index
    %c0_25 = arith.constant 0 : index
    %28 = vector.load %arg3[%c3, %c0_24, %c0_25] : memref<4x32x32xf32, #tpu.memory_space<vmem>>, vector<1x32x32xf32>
    %29 = vector.shape_cast %28 : vector<1x32x32xf32> to vector<32x32xf32>
    %cst_26 = arith.constant dense<0.000000e+00> : vector<64x32xf32>
    %30 = tpu.matmul %27, %29, %cst_26 {dimension_numbers = #tpu.dot_dimension_numbers<[1], [0], [0], [1], [0, 0, 1, 1], [], []>} : vector<64x32xf32>, vector<32x32xf32>, vector<64x32xf32> -> vector<64x32xf32>
    %cst_27 = arith.constant 0.000000e+00 : f32
    %31 = vector.broadcast %cst_27 : f32 to vector<64x32xf32>
    %32 = arith.maximumf %30, %31 : vector<64x32xf32>
    %cst_28 = arith.constant dense<0.000000e+00> : vector<64x32xf32>
    %33 = tpu.matmul %0, %32, %cst_28 {dimension_numbers = #tpu.dot_dimension_numbers<[1], [0], [0], [1], [0, 0, 1, 1], [], []>} : vector<64x64xf32>, vector<64x32xf32>, vector<64x32xf32> -> vector<64x32xf32>
    %c0_29 = arith.constant 0 : index
    %c0_30 = arith.constant 0 : index
    %34 = vector.load %arg5[%c0_29, %c0_30] : memref<64x32xf32, #tpu.memory_space<vmem>>, vector<64x32xf32>
    tpu.vector_store %arg5[%c0_29, %c0_30], %33 {strides = array<i32>} : memref<64x32xf32, #tpu.memory_space<vmem>>, vector<64x32xf32>,
    return
  }
  func.func @transform_0(%arg0: i32) -> (i32, i32) {
    %c0_i32 = arith.constant 0 : i32
    %c0_i32_0 = arith.constant 0 : i32
    %c0_i32_1 = arith.constant 0 : i32
    return %c0_i32, %c0_i32_0 : i32, i32
  }
  func.func @transform_1(%arg0: i32) -> (i32, i32) {
    %c0_i32 = arith.constant 0 : i32
    %c0_i32_0 = arith.constant 0 : i32
    %c0_i32_1 = arith.constant 0 : i32
    return %c0_i32, %c0_i32_0 : i32, i32
  }
  func.func @transform_2(%arg0: i32) -> (i32, i32, i32) {
    %c0_i32 = arith.constant 0 : i32
    %c0_i32_0 = arith.constant 0 : i32
    %c0_i32_1 = arith.constant 0 : i32
    %c0_i32_2 = arith.constant 0 : i32
    return %c0_i32, %c0_i32_0, %c0_i32_1 : i32, i32, i32
  }
  func.func @transform_3(%arg0: i32) -> (i32, i32, i32) {
    %c0_i32 = arith.constant 0 : i32
    %c0_i32_0 = arith.constant 0 : i32
    %c0_i32_1 = arith.constant 0 : i32
    %c0_i32_2 = arith.constant 0 : i32
    return %c0_i32, %c0_i32_0, %c0_i32_1 : i32, i32, i32
  }
  func.func @transform_4(%arg0: i32) -> (i32, i32) {
    %c0_i32 = arith.constant 0 : i32
    %c0_i32_0 = arith.constant 0 : i32
    %c0_i32_1 = arith.constant 0 : i32
    return %c0_i32, %c0_i32_0 : i32, i32
  }
}

</mosaic_0001>

<llo_original>
// kernel: node_prediction_gcn_forward.1
$region0: #{node_prediction_gcn_forward.1}
  #allocation0 [shape = 'u32[]', space=smem, size = 0x4, offset = 0x4, fixed_abs, tag = 'smem constant byte address 0x4 - core index']
  #allocation1 [shape = 'u32[144,128]{1,0:T(1,128)}', space=vmem, size = 0x12000, scoped, tag = 'internal scratch']
  %s0 = inlined_call_operand.vmem [shape: f32[64,32], index: 0, kind: input, shape index: {}]
  %s1 = inlined_call_operand.vmem [shape: f32[64,64], index: 1, kind: input, shape index: {}]
  %s2 = inlined_call_operand.vmem [shape: f32[4,32,32], index: 2, kind: input, shape index: {}]
  %s3 = inlined_call_operand.vmem [shape: f32[2,64,1], index: 3, kind: input, shape index: {}]
  %s4 = inlined_call_operand.vmem [shape: f32[64,32], index: 4, kind: output, shape index: {}]
  %s5 = sld [smem:[#allocation0]]
  $region26: #{node_prediction_gcn_forward.1} parent=0
    _
  %s7 = ssub.s32 1, %s5
  %s8 = scalar_select 0, %s7, %s5
  // Predicated region
  $region2: #{node_prediction_gcn_forward.1} parent=0 // pred_check
    _
  $region3: #{node_prediction_gcn_forward.1} parent=0 // pred_check_branch
    %10 = sbr.rel (0) target = $region5
  $region4: #{node_prediction_gcn_forward.1} parent=0 // pred_region
    _
  $region5: #{node_prediction_gcn_forward.1} parent=0 // pred_fallthru
    _
  // Predicated region
  $region6: #{node_prediction_gcn_forward.1} parent=0 // pred_check
    _
  $region7: #{node_prediction_gcn_forward.1} parent=0 // pred_check_branch
    %12 = sbr.rel (0) target = $region9
  $region8: #{node_prediction_gcn_forward.1} parent=0 // pred_region
    _
  $region9: #{node_prediction_gcn_forward.1} parent=0 // pred_fallthru
    _
  // Predicated region
  $region10: #{node_prediction_gcn_forward.1} parent=0 // pred_check
    _
  $region11: #{node_prediction_gcn_forward.1} parent=0 // pred_check_branch
    %14 = sbr.rel (0) target = $region13
  $region12: #{node_prediction_gcn_forward.1} parent=0 // pred_region
    _
  $region13: #{node_prediction_gcn_forward.1} parent=0 // pred_fallthru
    _
  // Predicated region
  $region14: #{node_prediction_gcn_forward.1} parent=0 // pred_check
    _
  $region15: #{node_prediction_gcn_forward.1} parent=0 // pred_check_branch
    %16 = sbr.rel (0) target = $region17
  $region16: #{node_prediction_gcn_forward.1} parent=0 // pred_region
    _
  $region17: #{node_prediction_gcn_forward.1} parent=0 // pred_fallthru
    _
  %v17 = vld [vmem:[%s1] sm:$0xff]
  %v18 = vld [vmem:[%s1 + $0x8] sm:$0xff]
  %v19 = vld [vmem:[%s1 + $0x10] sm:$0xff]
  %v20 = vld [vmem:[%s1 + $0x18] sm:$0xff]
  %v21 = vld [vmem:[%s1 + $0x20] sm:$0xff]
  %v22 = vld [vmem:[%s1 + $0x28] sm:$0xff]
  %v23 = vld [vmem:[%s1 + $0x30] sm:$0xff]
  %v24 = vld [vmem:[%s1 + $0x38] sm:$0xff]
  %v25 = vld [vmem:[%s0] sm:$0xff]
  %v26 = vld [vmem:[%s0 + $0x8] sm:$0xff]
  %v27 = vld [vmem:[%s0 + $0x10] sm:$0xff]
  %v28 = vld [vmem:[%s0 + $0x18] sm:$0xff]
  %v29 = vld [vmem:[%s0 + $0x20] sm:$0xff]
  %v30 = vld [vmem:[%s0 + $0x28] sm:$0xff]
  %v31 = vld [vmem:[%s0 + $0x30] sm:$0xff]
  %v32 = vld [vmem:[%s0 + $0x38] sm:$0xff]
  %v33 = vld [vmem:[%s2] sm:$0xff]
  %v34 = vld [vmem:[%s2 + $0x8] sm:$0xff]
  %v35 = vld [vmem:[%s2 + $0x10] sm:$0xff]
  %v36 = vld [vmem:[%s2 + $0x18] sm:$0xff]
  %vm37 = vcmask 261120
  %v39 = vsel %vm37, %v25, 0
  %v42 = vsel %vm37, %v26, 0
  %v45 = vsel %vm37, %v27, 0
  %v48 = vsel %vm37, %v28, 0
  %v51 = vsel %vm37, %v29, 0
  %v54 = vsel %vm37, %v30, 0
  %v57 = vsel %vm37, %v31, 0
  %v60 = vsel %vm37, %v32, 0
  %62 = vmatprep.subr.mxu0 0.0
  %63 = vmatpush1.msra.mxu0 0.0
  %64 = vmatprep.subr.mxu0 0.0
  %65 = vmatpush1.msra.mxu0 0.0
  %66 = vmatprep.subr.mxu0 0.0
  %67 = vmatpush1.msra.mxu0 0.0
  %68 = vmatprep.subr.mxu0 0.0
  %69 = vmatpush1.msra.mxu0 0.0
  %70 = vmatprep.subr.mxu0 0.0
  %71 = vmatpush1.msra.mxu0 0.0
  %72 = vmatprep.subr.mxu0 0.0
  %73 = vmatpush1.msra.mxu0 0.0
  %74 = vmatprep.subr.mxu0 0.0
  %75 = vmatpush1.msra.mxu0 0.0
  %76 = vmatprep.subr.mxu0 0.0
  %77 = vmatpush1.msra.mxu0 0.0
  %78 = vmatprep.subr.mxu0 0.0
  %79 = vmatpush1.msra.mxu0 0.0
  %80 = vmatprep.subr.mxu0 0.0
  %81 = vmatpush1.msra.mxu0 0.0
  %82 = vmatprep.subr.mxu0 0.0
  %83 = vmatpush1.msra.mxu0 0.0
  %84 = vmatprep.subr.mxu0 0.0
  %85 = vmatpush1.msra.mxu0 0.0
  %86 = vmatprep.subr.mxu0 0.0
  %87 = vmatpush1.msra.mxu0 %v36
  %88 = vmatprep.subr.mxu0 0.0
  %89 = vmatpush1.msra.mxu0 %v35
  %90 = vmatprep.subr.mxu0 0.0
  %91 = vmatpush1.msra.mxu0 %v34
  %92 = vmatprep.subr.mxu0 0.0
  %93 = vmatpush1.msra.mxu0 %v33
  %94 = vmatprep.subr.mxu0 0.0
  %95 = vmatpush2.msra.mxu0 0.0
  %96 = vmatprep.subr.mxu0 0.0
  %97 = vmatpush2.msra.mxu0 0.0
  %98 = vmatprep.subr.mxu0 0.0
  %99 = vmatpush2.msra.mxu0 0.0
  %100 = vmatprep.subr.mxu0 0.0
  %101 = vmatpush2.msra.mxu0 0.0
  %102 = vmatprep.subr.mxu0 0.0
  %103 = vmatpush2.msra.mxu0 0.0
  %104 = vmatprep.subr.mxu0 0.0
  %105 = vmatpush2.msra.mxu0 0.0
  %106 = vmatprep.subr.mxu0 0.0
  %107 = vmatpush2.msra.mxu0 0.0
  %108 = vmatprep.subr.mxu0 0.0
  %109 = vmatpush2.msra.mxu0 0.0
  %110 = vmatprep.subr.mxu0 0.0
  %111 = vmatpush2.msra.mxu0 0.0
  %112 = vmatprep.subr.mxu0 0.0
  %113 = vmatpush2.msra.mxu0 0.0
  %114 = vmatprep.subr.mxu0 0.0
  %115 = vmatpush2.msra.mxu0 0.0
  %116 = vmatprep.subr.mxu0 0.0
  %117 = vmatpush2.msra.mxu0 0.0
  %118 = vmatprep.subr.mxu0 0.0
  %119 = vmatpush2.msra.mxu0 0.0
  %120 = vmatprep.subr.mxu0 0.0
  %121 = vmatpush2.msra.mxu0 0.0
  %122 = vmatprep.subr.mxu0 0.0
  %123 = vmatpush2.msra.mxu0 0.0
  %124 = vmatprep.subr.mxu0 0.0
  %125 = vmatpush2.msra.mxu0 0.0
  %126 = vmatprep.mubr.f32.mxu0 0.0
  %127 = vmatmul.mubr.f32.gmra.mxu0 %v39
  %v128 = vpop.f32.mrf.mxu0
  %v129 = vadd.f32 0.0, %v128
  %v130 = vpop.f32.mrf.mxu0
  %131 = vmatprep.mubr.f32.mxu0 0.0
  %132 = vmatmul.mubr.f32.gmra.mxu0 %v42
  %v133 = vpop.f32.mrf.mxu0
  %v134 = vadd.f32 0.0, %v133
  %v135 = vpop.f32.mrf.mxu0
  %136 = vmatprep.mubr.f32.mxu0 0.0
  %137 = vmatmul.mubr.f32.gmra.mxu0 %v45
  %v138 = vpop.f32.mrf.mxu0
  %v139 = vadd.f32 0.0, %v138
  %v140 = vpop.f32.mrf.mxu0
  %141 = vmatprep.mubr.f32.mxu0 0.0
  %142 = vmatmul.mubr.f32.gmra.mxu0 %v48
  %v143 = vpop.f32.mrf.mxu0
  %v144 = vadd.f32 0.0, %v143
  %v145 = vpop.f32.mrf.mxu0
  %146 = vmatprep.mubr.f32.mxu0 0.0
  %147 = vmatmul.mubr.f32.gmra.mxu0 %v51
  %v148 = vpop.f32.mrf.mxu0
  %v149 = vadd.f32 0.0, %v148
  %v150 = vpop.f32.mrf.mxu0
  %151 = vmatprep.mubr.f32.mxu0 0.0
  %152 = vmatmul.mubr.f32.gmra.mxu0 %v54
  %v153 = vpop.f32.mrf.mxu0
  %v154 = vadd.f32 0.0, %v153
  %v155 = vpop.f32.mrf.mxu0
  %156 = vmatprep.mubr.f32.mxu0 0.0
  %157 = vmatmul.mubr.f32.gmra.mxu0 %v57
  %v158 = vpop.f32.mrf.mxu0
  %v159 = vadd.f32 0.0, %v158
  %v160 = vpop.f32.mrf.mxu0
  %161 = vmatprep.mubr.f32.mxu0 0.0
  %162 = vmatmul.mubr.f32.gmra.mxu0 %v60
  %v163 = vpop.f32.mrf.mxu0
  %v164 = vadd.f32 0.0, %v163
  %v165 = vpop.f32.mrf.mxu0
  %166 = vdwg.mxu0
  %v167 = vmax.f32 %v129, 0.0
  %v168 = vmax.f32 %v134, 0.0
  %v169 = vmax.f32 %v139, 0.0
  %v170 = vmax.f32 %v144, 0.0
  %v171 = vmax.f32 %v149, 0.0
  %v172 = vmax.f32 %v154, 0.0
  %v173 = vmax.f32 %v159, 0.0
  %v174 = vmax.f32 %v164, 0.0
  %vm175 = vcmask 523264
  %v177 = vsel %vm175, %v17, 0
  %v180 = vsel %vm175, %v18, 0
  %v183 = vsel %vm175, %v19, 0
  %v186 = vsel %vm175, %v20, 0
  %v189 = vsel %vm175, %v21, 0
  %v192 = vsel %vm175, %v22, 0
  %v195 = vsel %vm175, %v23, 0
  %v198 = vsel %vm175, %v24, 0
  %200 = vmatprep.subr.mxu0 0.0
  %201 = vmatpush1.msra.mxu0 0.0
  %202 = vmatprep.subr.mxu0 0.0
  %203 = vmatpush1.msra.mxu0 0.0
  %204 = vmatprep.subr.mxu0 0.0
  %205 = vmatpush1.msra.mxu0 0.0
  %206 = vmatprep.subr.mxu0 0.0
  %207 = vmatpush1.msra.mxu0 0.0
  %208 = vmatprep.subr.mxu0 0.0
  %209 = vmatpush1.msra.mxu0 0.0
  %210 = vmatprep.subr.mxu0 0.0
  %211 = vmatpush1.msra.mxu0 0.0
  %212 = vmatprep.subr.mxu0 0.0
  %213 = vmatpush1.msra.mxu0 0.0
  %214 = vmatprep.subr.mxu0 0.0
  %215 = vmatpush1.msra.mxu0 0.0
  %216 = vmatprep.subr.mxu0 0.0
  %217 = vmatpush1.msra.mxu0 %v174
  %218 = vmatprep.subr.mxu0 0.0
  %219 = vmatpush1.msra.mxu0 %v173
  %220 = vmatprep.subr.mxu0 0.0
  %221 = vmatpush1.msra.mxu0 %v172
  %222 = vmatprep.subr.mxu0 0.0
  %223 = vmatpush1.msra.mxu0 %v171
  %224 = vmatprep.subr.mxu0 0.0
  %225 = vmatpush1.msra.mxu0 %v170
  %226 = vmatprep.subr.mxu0 0.0
  %227 = vmatpush1.msra.mxu0 %v169
  %228 = vmatprep.subr.mxu0 0.0
  %229 = vmatpush1.msra.mxu0 %v168
  %230 = vmatprep.subr.mxu0 0.0
  %231 = vmatpush1.msra.mxu0 %v167
  %232 = vmatprep.subr.mxu0 0.0
  %233 = vmatpush2.msra.mxu0 0.0
  %234 = vmatprep.subr.mxu0 0.0
  %235 = vmatpush2.msra.mxu0 0.0
  %236 = vmatprep.subr.mxu0 0.0
  %237 = vmatpush2.msra.mxu0 0.0
  %238 = vmatprep.subr.mxu0 0.0
  %239 = vmatpush2.msra.mxu0 0.0
  %240 = vmatprep.subr.mxu0 0.0
  %241 = vmatpush2.msra.mxu0 0.0
  %242 = vmatprep.subr.mxu0 0.0
  %243 = vmatpush2.msra.mxu0 0.0
  %244 = vmatprep.subr.mxu0 0.0
  %245 = vmatpush2.msra.mxu0 0.0
  %246 = vmatprep.subr.mxu0 0.0
  %247 = vmatpush2.msra.mxu0 0.0
  %248 = vmatprep.subr.mxu0 0.0
  %249 = vmatpush2.msra.mxu0 0.0
  %250 = vmatprep.subr.mxu0 0.0
  %251 = vmatpush2.msra.mxu0 0.0
  %252 = vmatprep.subr.mxu0 0.0
  %253 = vmatpush2.msra.mxu0 0.0
  %254 = vmatprep.subr.mxu0 0.0
  %255 = vmatpush2.msra.mxu0 0.0
  %256 = vmatprep.subr.mxu0 0.0
  %257 = vmatpush2.msra.mxu0 0.0
  %258 = vmatprep.subr.mxu0 0.0
  %259 = vmatpush2.msra.mxu0 0.0
  %260 = vmatprep.subr.mxu0 0.0
  %261 = vmatpush2.msra.mxu0 0.0
  %262 = vmatprep.subr.mxu0 0.0
  %263 = vmatpush2.msra.mxu0 0.0
  %264 = vmatprep.mubr.f32.mxu0 0.0
  %265 = vmatmul.mubr.f32.gmra.mxu0 %v177
  %v266 = vpop.f32.mrf.mxu0
  %v267 = vadd.f32 0.0, %v266
  %v268 = vpop.f32.mrf.mxu0
  %269 = vmatprep.mubr.f32.mxu0 0.0
  %270 = vmatmul.mubr.f32.gmra.mxu0 %v180
  %v271 = vpop.f32.mrf.mxu0
  %v272 = vadd.f32 0.0, %v271
  %v273 = vpop.f32.mrf.mxu0
  %274 = vmatprep.mubr.f32.mxu0 0.0
  %275 = vmatmul.mubr.f32.gmra.mxu0 %v183
  %v276 = vpop.f32.mrf.mxu0
  %v277 = vadd.f32 0.0, %v276
  %v278 = vpop.f32.mrf.mxu0
  %279 = vmatprep.mubr.f32.mxu0 0.0
  %280 = vmatmul.mubr.f32.gmra.mxu0 %v186
  %v281 = vpop.f32.mrf.mxu0
  %v282 = vadd.f32 0.0, %v281
  %v283 = vpop.f32.mrf.mxu0
  %284 = vmatprep.mubr.f32.mxu0 0.0
  %285 = vmatmul.mubr.f32.gmra.mxu0 %v189
  %v286 = vpop.f32.mrf.mxu0
  %v287 = vadd.f32 0.0, %v286
  %v288 = vpop.f32.mrf.mxu0
  %289 = vmatprep.mubr.f32.mxu0 0.0
  %290 = vmatmul.mubr.f32.gmra.mxu0 %v192
  %v291 = vpop.f32.mrf.mxu0
  %v292 = vadd.f32 0.0, %v291
  %v293 = vpop.f32.mrf.mxu0
  %294 = vmatprep.mubr.f32.mxu0 0.0
  %295 = vmatmul.mubr.f32.gmra.mxu0 %v195
  %v296 = vpop.f32.mrf.mxu0
  %v297 = vadd.f32 0.0, %v296
  %v298 = vpop.f32.mrf.mxu0
  %299 = vmatprep.mubr.f32.mxu0 0.0
  %300 = vmatmul.mubr.f32.gmra.mxu0 %v198
  %v301 = vpop.f32.mrf.mxu0
  %v302 = vadd.f32 0.0, %v301
  %v303 = vpop.f32.mrf.mxu0
  %304 = vdwg.mxu0
  %s305 = scalar_lea.vmem %s2, 32
  %v306 = vld [vmem:[%s305] sm:$0xff]
  %v307 = vld [vmem:[%s305 + $0x8] sm:$0xff]
  %v308 = vld [vmem:[%s305 + $0x10] sm:$0xff]
  %v309 = vld [vmem:[%s305 + $0x18] sm:$0xff]
  %v311 = vsel %vm37, %v267, 0
  %v314 = vsel %vm37, %v272, 0
  %v317 = vsel %vm37, %v277, 0
  %v320 = vsel %vm37, %v282, 0
  %v323 = vsel %vm37, %v287, 0
  %v326 = vsel %vm37, %v292, 0
  %v329 = vsel %vm37, %v297, 0
  %v332 = vsel %vm37, %v302, 0
  %334 = vmatprep.subr.mxu0 0.0
  %335 = vmatpush1.msra.mxu0 0.0
  %336 = vmatprep.subr.mxu0 0.0
  %337 = vmatpush1.msra.mxu0 0.0
  %338 = vmatprep.subr.mxu0 0.0
  %339 = vmatpush1.msra.mxu0 0.0
  %340 = vmatprep.subr.mxu0 0.0
  %341 = vmatpush1.msra.mxu0 0.0
  %342 = vmatprep.subr.mxu0 0.0
  %343 = vmatpush1.msra.mxu0 0.0
  %344 = vmatprep.subr.mxu0 0.0
  %345 = vmatpush1.msra.mxu0 0.0
  %346 = vmatprep.subr.mxu0 0.0
  %347 = vmatpush1.msra.mxu0 0.0
  %348 = vmatprep.subr.mxu0 0.0
  %349 = vmatpush1.msra.mxu0 0.0
  %350 = vmatprep.subr.mxu0 0.0
  %351 = vmatpush1.msra.mxu0 0.0
  %352 = vmatprep.subr.mxu0 0.0
  %353 = vmatpush1.msra.mxu0 0.0
  %354 = vmatprep.subr.mxu0 0.0
  %355 = vmatpush1.msra.mxu0 0.0
  %356 = vmatprep.subr.mxu0 0.0
  %357 = vmatpush1.msra.mxu0 0.0
  %358 = vmatprep.subr.mxu0 0.0
  %359 = vmatpush1.msra.mxu0 %v309
  %360 = vmatprep.subr.mxu0 0.0
  %361 = vmatpush1.msra.mxu0 %v308
  %362 = vmatprep.subr.mxu0 0.0
  %363 = vmatpush1.msra.mxu0 %v307
  %364 = vmatprep.subr.mxu0 0.0
  %365 = vmatpush1.msra.mxu0 %v306
  %366 = vmatprep.subr.mxu0 0.0
  %367 = vmatpush2.msra.mxu0 0.0
  %368 = vmatprep.subr.mxu0 0.0
  %369 = vmatpush2.msra.mxu0 0.0
  %370 = vmatprep.subr.mxu0 0.0
  %371 = vmatpush2.msra.mxu0 0.0
  %372 = vmatprep.subr.mxu0 0.0
  %373 = vmatpush2.msra.mxu0 0.0
  %374 = vmatprep.subr.mxu0 0.0
  %375 = vmatpush2.msra.mxu0 0.0
  %376 = vmatprep.subr.mxu0 0.0
  %377 = vmatpush2.msra.mxu0 0.0
  %378 = vmatprep.subr.mxu0 0.0
  %379 = vmatpush2.msra.mxu0 0.0
  %380 = vmatprep.subr.mxu0 0.0
  %381 = vmatpush2.msra.mxu0 0.0
  %382 = vmatprep.subr.mxu0 0.0
  %383 = vmatpush2.msra.mxu0 0.0
  %384 = vmatprep.subr.mxu0 0.0
  %385 = vmatpush2.msra.mxu0 0.0
  %386 = vmatprep.subr.mxu0 0.0
  %387 = vmatpush2.msra.mxu0 0.0
  %388 = vmatprep.subr.mxu0 0.0
  %389 = vmatpush2.msra.mxu0 0.0
  %390 = vmatprep.subr.mxu0 0.0
  %391 = vmatpush2.msra.mxu0 0.0
  %392 = vmatprep.subr.mxu0 0.0
  %393 = vmatpush2.msra.mxu0 0.0
  %394 = vmatprep.subr.mxu0 0.0
  %395 = vmatpush2.msra.mxu0 0.0
  %396 = vmatprep.subr.mxu0 0.0
  %397 = vmatpush2.msra.mxu0 0.0
  %398 = vmatprep.mubr.f32.mxu0 0.0
  %399 = vmatmul.mubr.f32.gmra.mxu0 %v311
  %v400 = vpop.f32.mrf.mxu0
  %v401 = vadd.f32 0.0, %v400
  %v402 = vpop.f32.mrf.mxu0
  %403 = vmatprep.mubr.f32.mxu0 0.0
  %404 = vmatmul.mubr.f32.gmra.mxu0 %v314
  %v405 = vpop.f32.mrf.mxu0
  %v406 = vadd.f32 0.0, %v405
  %v407 = vpop.f32.mrf.mxu0
  %408 = vmatprep.mubr.f32.mxu0 0.0
  %409 = vmatmul.mubr.f32.gmra.mxu0 %v317
  %v410 = vpop.f32.mrf.mxu0
  %v411 = vadd.f32 0.0, %v410
  %v412 = vpop.f32.mrf.mxu0
  %413 = vmatprep.mubr.f32.mxu0 0.0
  %414 = vmatmul.mubr.f32.gmra.mxu0 %v320
  %v415 = vpop.f32.mrf.mxu0
  %v416 = vadd.f32 0.0, %v415
  %v417 = vpop.f32.mrf.mxu0
  %418 = vmatprep.mubr.f32.mxu0 0.0
  %419 = vmatmul.mubr.f32.gmra.mxu0 %v323
  %v420 = vpop.f32.mrf.mxu0
  %v421 = vadd.f32 0.0, %v420
  %v422 = vpop.f32.mrf.mxu0
  %423 = vmatprep.mubr.f32.mxu0 0.0
  %424 = vmatmul.mubr.f32.gmra.mxu0 %v326
  %v425 = vpop.f32.mrf.mxu0
  %v426 = vadd.f32 0.0, %v425
  %v427 = vpop.f32.mrf.mxu0
  %428 = vmatprep.mubr.f32.mxu0 0.0
  %429 = vmatmul.mubr.f32.gmra.mxu0 %v329
  %v430 = vpop.f32.mrf.mxu0
  %v431 = vadd.f32 0.0, %v430
  %v432 = vpop.f32.mrf.mxu0
  %433 = vmatprep.mubr.f32.mxu0 0.0
  %434 = vmatmul.mubr.f32.gmra.mxu0 %v332
  %v435 = vpop.f32.mrf.mxu0
  %v436 = vadd.f32 0.0, %v435
  %v437 = vpop.f32.mrf.mxu0
  %438 = vdwg.mxu0
  %v439 = vmax.f32 %v401, 0.0
  %v440 = vmax.f32 %v406, 0.0
  %v441 = vmax.f32 %v411, 0.0
  %v442 = vmax.f32 %v416, 0.0
  %v443 = vmax.f32 %v421, 0.0
  %v444 = vmax.f32 %v426, 0.0
  %v445 = vmax.f32 %v431, 0.0
  %v446 = vmax.f32 %v436, 0.0
  %447 = vmatprep.subr.mxu0 0.0
  %448 = vmatpush1.msra.mxu0 0.0
  %449 = vmatprep.subr.mxu0 0.0
  %450 = vmatpush1.msra.mxu0 0.0
  %451 = vmatprep.subr.mxu0 0.0
  %452 = vmatpush1.msra.mxu0 0.0
  %453 = vmatprep.subr.mxu0 0.0
  %454 = vmatpush1.msra.mxu0 0.0
  %455 = vmatprep.subr.mxu0 0.0
  %456 = vmatpush1.msra.mxu0 0.0
  %457 = vmatprep.subr.mxu0 0.0
  %458 = vmatpush1.msra.mxu0 0.0
  %459 = vmatprep.subr.mxu0 0.0
  %460 = vmatpush1.msra.mxu0 0.0
  %461 = vmatprep.subr.mxu0 0.0
  %462 = vmatpush1.msra.mxu0 0.0
  %463 = vmatprep.subr.mxu0 0.0
  %464 = vmatpush1.msra.mxu0 %v446
  %465 = vmatprep.subr.mxu0 0.0
  %466 = vmatpush1.msra.mxu0 %v445
  %467 = vmatprep.subr.mxu0 0.0
  %468 = vmatpush1.msra.mxu0 %v444
  %469 = vmatprep.subr.mxu0 0.0
  %470 = vmatpush1.msra.mxu0 %v443
  %471 = vmatprep.subr.mxu0 0.0
  %472 = vmatpush1.msra.mxu0 %v442
  %473 = vmatprep.subr.mxu0 0.0
  %474 = vmatpush1.msra.mxu0 %v441
  %475 = vmatprep.subr.mxu0 0.0
  %476 = vmatpush1.msra.mxu0 %v440
  %477 = vmatprep.subr.mxu0 0.0
  %478 = vmatpush1.msra.mxu0 %v439
  %479 = vmatprep.subr.mxu0 0.0
  %480 = vmatpush2.msra.mxu0 0.0
  %481 = vmatprep.subr.mxu0 0.0
  %482 = vmatpush2.msra.mxu0 0.0
  %483 = vmatprep.subr.mxu0 0.0
  %484 = vmatpush2.msra.mxu0 0.0
  %485 = vmatprep.subr.mxu0 0.0
  %486 = vmatpush2.msra.mxu0 0.0
  %487 = vmatprep.subr.mxu0 0.0
  %488 = vmatpush2.msra.mxu0 0.0
  %489 = vmatprep.subr.mxu0 0.0
  %490 = vmatpush2.msra.mxu0 0.0
  %491 = vmatprep.subr.mxu0 0.0
  %492 = vmatpush2.msra.mxu0 0.0
  %493 = vmatprep.subr.mxu0 0.0
  %494 = vmatpush2.msra.mxu0 0.0
  %495 = vmatprep.subr.mxu0 0.0
  %496 = vmatpush2.msra.mxu0 0.0
  %497 = vmatprep.subr.mxu0 0.0
  %498 = vmatpush2.msra.mxu0 0.0
  %499 = vmatprep.subr.mxu0 0.0
  %500 = vmatpush2.msra.mxu0 0.0
  %501 = vmatprep.subr.mxu0 0.0
  %502 = vmatpush2.msra.mxu0 0.0
  %503 = vmatprep.subr.mxu0 0.0
  %504 = vmatpush2.msra.mxu0 0.0
  %505 = vmatprep.subr.mxu0 0.0
  %506 = vmatpush2.msra.mxu0 0.0
  %507 = vmatprep.subr.mxu0 0.0
  %508 = vmatpush2.msra.mxu0 0.0
  %509 = vmatprep.subr.mxu0 0.0
  %510 = vmatpush2.msra.mxu0 0.0
  %511 = vmatprep.mubr.f32.mxu0 0.0
  %512 = vmatmul.mubr.f32.gmra.mxu0 %v177
  %v513 = vpop.f32.mrf.mxu0
  %v514 = vadd.f32 0.0, %v513
  %v515 = vpop.f32.mrf.mxu0
  %516 = vmatprep.mubr.f32.mxu0 0.0
  %517 = vmatmul.mubr.f32.gmra.mxu0 %v180
  %v518 = vpop.f32.mrf.mxu0
  %v519 = vadd.f32 0.0, %v518
  %v520 = vpop.f32.mrf.mxu0
  %521 = vmatprep.mubr.f32.mxu0 0.0
  %522 = vmatmul.mubr.f32.gmra.mxu0 %v183
  %v523 = vpop.f32.mrf.mxu0
  %v524 = vadd.f32 0.0, %v523
  %v525 = vpop.f32.mrf.mxu0
  %526 = vmatprep.mubr.f32.mxu0 0.0
  %527 = vmatmul.mubr.f32.gmra.mxu0 %v186
  %v528 = vpop.f32.mrf.mxu0
  %v529 = vadd.f32 0.0, %v528
  %v530 = vpop.f32.mrf.mxu0
  %531 = vmatprep.mubr.f32.mxu0 0.0
  %532 = vmatmul.mubr.f32.gmra.mxu0 %v189
  %v533 = vpop.f32.mrf.mxu0
  %v534 = vadd.f32 0.0, %v533
  %v535 = vpop.f32.mrf.mxu0
  %536 = vmatprep.mubr.f32.mxu0 0.0
  %537 = vmatmul.mubr.f32.gmra.mxu0 %v192
  %v538 = vpop.f32.mrf.mxu0
  %v539 = vadd.f32 0.0, %v538
  %v540 = vpop.f32.mrf.mxu0
  %541 = vmatprep.mubr.f32.mxu0 0.0
  %542 = vmatmul.mubr.f32.gmra.mxu0 %v195
  %v543 = vpop.f32.mrf.mxu0
  %v544 = vadd.f32 0.0, %v543
  %v545 = vpop.f32.mrf.mxu0
  %546 = vmatprep.mubr.f32.mxu0 0.0
  %547 = vmatmul.mubr.f32.gmra.mxu0 %v198
  %v548 = vpop.f32.mrf.mxu0
  %v549 = vadd.f32 0.0, %v548
  %v550 = vpop.f32.mrf.mxu0
  %551 = vdwg.mxu0
  %v552 = vld [vmem:[%s3] sm:$0xff]
  %v553 = vld [vmem:[%s3 + $0x8] sm:$0xff]
  %v554 = vld [vmem:[%s3 + $0x10] sm:$0xff]
  %v555 = vld [vmem:[%s3 + $0x18] sm:$0xff]
  %v556 = vld [vmem:[%s3 + $0x20] sm:$0xff]
  %v557 = vld [vmem:[%s3 + $0x28] sm:$0xff]
  %v558 = vld [vmem:[%s3 + $0x30] sm:$0xff]
  %v559 = vld [vmem:[%s3 + $0x38] sm:$0xff]
  %561 = vset.pattern.permute.xlu0 0
  %562 = vperm.xlu0 %561, %v552
  %v563 = vpop.permute.xlu0 %562
  %566 = vset.pattern.permute.xlu0 0
  %567 = vperm.xlu0 %566, %v553
  %v568 = vpop.permute.xlu0 %567
  %571 = vset.pattern.permute.xlu0 0
  %572 = vperm.xlu0 %571, %v554
  %v573 = vpop.permute.xlu0 %572
  %576 = vset.pattern.permute.xlu0 0
  %577 = vperm.xlu0 %576, %v555
  %v578 = vpop.permute.xlu0 %577
  %581 = vset.pattern.permute.xlu0 0
  %582 = vperm.xlu0 %581, %v556
  %v583 = vpop.permute.xlu0 %582
  %586 = vset.pattern.permute.xlu0 0
  %587 = vperm.xlu0 %586, %v557
  %v588 = vpop.permute.xlu0 %587
  %591 = vset.pattern.permute.xlu0 0
  %592 = vperm.xlu0 %591, %v558
  %v593 = vpop.permute.xlu0 %592
  %596 = vset.pattern.permute.xlu0 0
  %597 = vperm.xlu0 %596, %v559
  %v598 = vpop.permute.xlu0 %597
  %v600 = vmul.f32 %v514, %v563
  %v601 = vmul.f32 %v519, %v568
  %v602 = vmul.f32 %v524, %v573
  %v603 = vmul.f32 %v529, %v578
  %v604 = vmul.f32 %v534, %v583
  %v605 = vmul.f32 %v539, %v588
  %v606 = vmul.f32 %v544, %v593
  %v607 = vmul.f32 %v549, %v598
  %s608 = scalar_lea.vmem %s3, 64
  %v609 = vld [vmem:[%s608] sm:$0xff]
  %v610 = vld [vmem:[%s608 + $0x8] sm:$0xff]
  %v611 = vld [vmem:[%s608 + $0x10] sm:$0xff]
  %v612 = vld [vmem:[%s608 + $0x18] sm:$0xff]
  %v613 = vld [vmem:[%s608 + $0x20] sm:$0xff]
  %v614 = vld [vmem:[%s608 + $0x28] sm:$0xff]
  %v615 = vld [vmem:[%s608 + $0x30] sm:$0xff]
  %v616 = vld [vmem:[%s608 + $0x38] sm:$0xff]
  %618 = vset.pattern.permute.xlu0 0
  %619 = vperm.xlu0 %618, %v609
  %v620 = vpop.permute.xlu0 %619
  %623 = vset.pattern.permute.xlu0 0
  %624 = vperm.xlu0 %623, %v610
  %v625 = vpop.permute.xlu0 %624
  %628 = vset.pattern.permute.xlu0 0
  %629 = vperm.xlu0 %628, %v611
  %v630 = vpop.permute.xlu0 %629
  %633 = vset.pattern.permute.xlu0 0
  %634 = vperm.xlu0 %633, %v612
  %v635 = vpop.permute.xlu0 %634
  %638 = vset.pattern.permute.xlu0 0
  %639 = vperm.xlu0 %638, %v613
  %v640 = vpop.permute.xlu0 %639
  %643 = vset.pattern.permute.xlu0 0
  %644 = vperm.xlu0 %643, %v614
  %v645 = vpop.permute.xlu0 %644
  %648 = vset.pattern.permute.xlu0 0
  %649 = vperm.xlu0 %648, %v615
  %v650 = vpop.permute.xlu0 %649
  %653 = vset.pattern.permute.xlu0 0
  %654 = vperm.xlu0 %653, %v616
  %v655 = vpop.permute.xlu0 %654
  %v657 = vadd.f32 %v600, %v620
  %v658 = vadd.f32 %v601, %v625
  %v659 = vadd.f32 %v602, %v630
  %v660 = vadd.f32 %v603, %v635
  %v661 = vadd.f32 %v604, %v640
  %v662 = vadd.f32 %v605, %v645
  %v663 = vadd.f32 %v606, %v650
  %v664 = vadd.f32 %v607, %v655
  %s665 = scalar_lea.vmem %s2, 64
  %v666 = vld [vmem:[%s665] sm:$0xff]
  %v667 = vld [vmem:[%s665 + $0x8] sm:$0xff]
  %v668 = vld [vmem:[%s665 + $0x10] sm:$0xff]
  %v669 = vld [vmem:[%s665 + $0x18] sm:$0xff]
  %v671 = vsel %vm37, %v657, 0
  %v674 = vsel %vm37, %v658, 0
  %v677 = vsel %vm37, %v659, 0
  %v680 = vsel %vm37, %v660, 0
  %v683 = vsel %vm37, %v661, 0
  %v686 = vsel %vm37, %v662, 0
  %v689 = vsel %vm37, %v663, 0
  %v692 = vsel %vm37, %v664, 0
  %694 = vmatprep.subr.mxu0 0.0
  %695 = vmatpush1.msra.mxu0 0.0
  %696 = vmatprep.subr.mxu0 0.0
  %697 = vmatpush1.msra.mxu0 0.0
  %698 = vmatprep.subr.mxu0 0.0
  %699 = vmatpush1.msra.mxu0 0.0
  %700 = vmatprep.subr.mxu0 0.0
  %701 = vmatpush1.msra.mxu0 0.0
  %702 = vmatprep.subr.mxu0 0.0
  %703 = vmatpush1.msra.mxu0 0.0
  %704 = vmatprep.subr.mxu0 0.0
  %705 = vmatpush1.msra.mxu0 0.0
  %706 = vmatprep.subr.mxu0 0.0
  %707 = vmatpush1.msra.mxu0 0.0
  %708 = vmatprep.subr.mxu0 0.0
  %709 = vmatpush1.msra.mxu0 0.0
  %710 = vmatprep.subr.mxu0 0.0
  %711 = vmatpush1.msra.mxu0 0.0
  %712 = vmatprep.subr.mxu0 0.0
  %713 = vmatpush1.msra.mxu0 0.0
  %714 = vmatprep.subr.mxu0 0.0
  %715 = vmatpush1.msra.mxu0 0.0
  %716 = vmatprep.subr.mxu0 0.0
  %717 = vmatpush1.msra.mxu0 0.0
  %718 = vmatprep.subr.mxu0 0.0
  %719 = vmatpush1.msra.mxu0 %v669
  %720 = vmatprep.subr.mxu0 0.0
  %721 = vmatpush1.msra.mxu0 %v668
  %722 = vmatprep.subr.mxu0 0.0
  %723 = vmatpush1.msra.mxu0 %v667
  %724 = vmatprep.subr.mxu0 0.0
  %725 = vmatpush1.msra.mxu0 %v666
  %726 = vmatprep.subr.mxu0 0.0
  %727 = vmatpush2.msra.mxu0 0.0
  %728 = vmatprep.subr.mxu0 0.0
  %729 = vmatpush2.msra.mxu0 0.0
  %730 = vmatprep.subr.mxu0 0.0
  %731 = vmatpush2.msra.mxu0 0.0
  %732 = vmatprep.subr.mxu0 0.0
  %733 = vmatpush2.msra.mxu0 0.0
  %734 = vmatprep.subr.mxu0 0.0
  %735 = vmatpush2.msra.mxu0 0.0
  %736 = vmatprep.subr.mxu0 0.0
  %737 = vmatpush2.msra.mxu0 0.0
  %738 = vmatprep.subr.mxu0 0.0
  %739 = vmatpush2.msra.mxu0 0.0
  %740 = vmatprep.subr.mxu0 0.0
  %741 = vmatpush2.msra.mxu0 0.0
  %742 = vmatprep.subr.mxu0 0.0
  %743 = vmatpush2.msra.mxu0 0.0
  %744 = vmatprep.subr.mxu0 0.0
  %745 = vmatpush2.msra.mxu0 0.0
  %746 = vmatprep.subr.mxu0 0.0
  %747 = vmatpush2.msra.mxu0 0.0
  %748 = vmatprep.subr.mxu0 0.0
  %749 = vmatpush2.msra.mxu0 0.0
  %750 = vmatprep.subr.mxu0 0.0
  %751 = vmatpush2.msra.mxu0 0.0
  %752 = vmatprep.subr.mxu0 0.0
  %753 = vmatpush2.msra.mxu0 0.0
  %754 = vmatprep.subr.mxu0 0.0
  %755 = vmatpush2.msra.mxu0 0.0
  %756 = vmatprep.subr.mxu0 0.0
  %757 = vmatpush2.msra.mxu0 0.0
  %758 = vmatprep.mubr.f32.mxu0 0.0
  %759 = vmatmul.mubr.f32.gmra.mxu0 %v671
  %v760 = vpop.f32.mrf.mxu0
  %v761 = vadd.f32 0.0, %v760
  %v762 = vpop.f32.mrf.mxu0
  %763 = vmatprep.mubr.f32.mxu0 0.0
  %764 = vmatmul.mubr.f32.gmra.mxu0 %v674
  %v765 = vpop.f32.mrf.mxu0
  %v766 = vadd.f32 0.0, %v765
  %v767 = vpop.f32.mrf.mxu0
  %768 = vmatprep.mubr.f32.mxu0 0.0
  %769 = vmatmul.mubr.f32.gmra.mxu0 %v677
  %v770 = vpop.f32.mrf.mxu0
  %v771 = vadd.f32 0.0, %v770
  %v772 = vpop.f32.mrf.mxu0
  %773 = vmatprep.mubr.f32.mxu0 0.0
  %774 = vmatmul.mubr.f32.gmra.mxu0 %v680
  %v775 = vpop.f32.mrf.mxu0
  %v776 = vadd.f32 0.0, %v775
  %v777 = vpop.f32.mrf.mxu0
  %778 = vmatprep.mubr.f32.mxu0 0.0
  %779 = vmatmul.mubr.f32.gmra.mxu0 %v683
  %v780 = vpop.f32.mrf.mxu0
  %v781 = vadd.f32 0.0, %v780
  %v782 = vpop.f32.mrf.mxu0
  %783 = vmatprep.mubr.f32.mxu0 0.0
  %784 = vmatmul.mubr.f32.gmra.mxu0 %v686
  %v785 = vpop.f32.mrf.mxu0
  %v786 = vadd.f32 0.0, %v785
  %v787 = vpop.f32.mrf.mxu0
  %788 = vmatprep.mubr.f32.mxu0 0.0
  %789 = vmatmul.mubr.f32.gmra.mxu0 %v689
  %v790 = vpop.f32.mrf.mxu0
  %v791 = vadd.f32 0.0, %v790
  %v792 = vpop.f32.mrf.mxu0
  %793 = vmatprep.mubr.f32.mxu0 0.0
  %794 = vmatmul.mubr.f32.gmra.mxu0 %v692
  %v795 = vpop.f32.mrf.mxu0
  %v796 = vadd.f32 0.0, %v795
  %v797 = vpop.f32.mrf.mxu0
  %798 = vdwg.mxu0
  %v799 = vmax.f32 %v761, 0.0
  %v800 = vmax.f32 %v766, 0.0
  %v801 = vmax.f32 %v771, 0.0
  %v802 = vmax.f32 %v776, 0.0
  %v803 = vmax.f32 %v781, 0.0
  %v804 = vmax.f32 %v786, 0.0
  %v805 = vmax.f32 %v791, 0.0
  %v806 = vmax.f32 %v796, 0.0
  %807 = vmatprep.subr.mxu0 0.0
  %808 = vmatpush1.msra.mxu0 0.0
  %809 = vmatprep.subr.mxu0 0.0
  %810 = vmatpush1.msra.mxu0 0.0
  %811 = vmatprep.subr.mxu0 0.0
  %812 = vmatpush1.msra.mxu0 0.0
  %813 = vmatprep.subr.mxu0 0.0
  %814 = vmatpush1.msra.mxu0 0.0
  %815 = vmatprep.subr.mxu0 0.0
  %816 = vmatpush1.msra.mxu0 0.0
  %817 = vmatprep.subr.mxu0 0.0
  %818 = vmatpush1.msra.mxu0 0.0
  %819 = vmatprep.subr.mxu0 0.0
  %820 = vmatpush1.msra.mxu0 0.0
  %821 = vmatprep.subr.mxu0 0.0
  %822 = vmatpush1.msra.mxu0 0.0
  %823 = vmatprep.subr.mxu0 0.0
  %824 = vmatpush1.msra.mxu0 %v806
  %825 = vmatprep.subr.mxu0 0.0
  %826 = vmatpush1.msra.mxu0 %v805
  %827 = vmatprep.subr.mxu0 0.0
  %828 = vmatpush1.msra.mxu0 %v804
  %829 = vmatprep.subr.mxu0 0.0
  %830 = vmatpush1.msra.mxu0 %v803
  %831 = vmatprep.subr.mxu0 0.0
  %832 = vmatpush1.msra.mxu0 %v802
  %833 = vmatprep.subr.mxu0 0.0
  %834 = vmatpush1.msra.mxu0 %v801
  %835 = vmatprep.subr.mxu0 0.0
  %836 = vmatpush1.msra.mxu0 %v800
  %837 = vmatprep.subr.mxu0 0.0
  %838 = vmatpush1.msra.mxu0 %v799
  %839 = vmatprep.subr.mxu0 0.0
  %840 = vmatpush2.msra.mxu0 0.0
  %841 = vmatprep.subr.mxu0 0.0
  %842 = vmatpush2.msra.mxu0 0.0
  %843 = vmatprep.subr.mxu0 0.0
  %844 = vmatpush2.msra.mxu0 0.0
  %845 = vmatprep.subr.mxu0 0.0
  %846 = vmatpush2.msra.mxu0 0.0
  %847 = vmatprep.subr.mxu0 0.0
  %848 = vmatpush2.msra.mxu0 0.0
  %849 = vmatprep.subr.mxu0 0.0
  %850 = vmatpush2.msra.mxu0 0.0
  %851 = vmatprep.subr.mxu0 0.0
  %852 = vmatpush2.msra.mxu0 0.0
  %853 = vmatprep.subr.mxu0 0.0
  %854 = vmatpush2.msra.mxu0 0.0
  %855 = vmatprep.subr.mxu0 0.0
  %856 = vmatpush2.msra.mxu0 0.0
  %857 = vmatprep.subr.mxu0 0.0
  %858 = vmatpush2.msra.mxu0 0.0
  %859 = vmatprep.subr.mxu0 0.0
  %860 = vmatpush2.msra.mxu0 0.0
  %861 = vmatprep.subr.mxu0 0.0
  %862 = vmatpush2.msra.mxu0 0.0
  %863 = vmatprep.subr.mxu0 0.0
  %864 = vmatpush2.msra.mxu0 0.0
  %865 = vmatprep.subr.mxu0 0.0
  %866 = vmatpush2.msra.mxu0 0.0
  %867 = vmatprep.subr.mxu0 0.0
  %868 = vmatpush2.msra.mxu0 0.0
  %869 = vmatprep.subr.mxu0 0.0
  %870 = vmatpush2.msra.mxu0 0.0
  %871 = vmatprep.mubr.f32.mxu0 0.0
  %872 = vmatmul.mubr.f32.gmra.mxu0 %v177
  %v873 = vpop.f32.mrf.mxu0
  %v874 = vadd.f32 0.0, %v873
  %v875 = vpop.f32.mrf.mxu0
  %876 = vmatprep.mubr.f32.mxu0 0.0
  %877 = vmatmul.mubr.f32.gmra.mxu0 %v180
  %v878 = vpop.f32.mrf.mxu0
  %v879 = vadd.f32 0.0, %v878
  %v880 = vpop.f32.mrf.mxu0
  %881 = vmatprep.mubr.f32.mxu0 0.0
  %882 = vmatmul.mubr.f32.gmra.mxu0 %v183
  %v883 = vpop.f32.mrf.mxu0
  %v884 = vadd.f32 0.0, %v883
  %v885 = vpop.f32.mrf.mxu0
  %886 = vmatprep.mubr.f32.mxu0 0.0
  %887 = vmatmul.mubr.f32.gmra.mxu0 %v186
  %v888 = vpop.f32.mrf.mxu0
  %v889 = vadd.f32 0.0, %v888
  %v890 = vpop.f32.mrf.mxu0
  %891 = vmatprep.mubr.f32.mxu0 0.0
  %892 = vmatmul.mubr.f32.gmra.mxu0 %v189
  %v893 = vpop.f32.mrf.mxu0
  %v894 = vadd.f32 0.0, %v893
  %v895 = vpop.f32.mrf.mxu0
  %896 = vmatprep.mubr.f32.mxu0 0.0
  %897 = vmatmul.mubr.f32.gmra.mxu0 %v192
  %v898 = vpop.f32.mrf.mxu0
  %v899 = vadd.f32 0.0, %v898
  %v900 = vpop.f32.mrf.mxu0
  %901 = vmatprep.mubr.f32.mxu0 0.0
  %902 = vmatmul.mubr.f32.gmra.mxu0 %v195
  %v903 = vpop.f32.mrf.mxu0
  %v904 = vadd.f32 0.0, %v903
  %v905 = vpop.f32.mrf.mxu0
  %906 = vmatprep.mubr.f32.mxu0 0.0
  %907 = vmatmul.mubr.f32.gmra.mxu0 %v198
  %v908 = vpop.f32.mrf.mxu0
  %v909 = vadd.f32 0.0, %v908
  %v910 = vpop.f32.mrf.mxu0
  %911 = vdwg.mxu0
  %s912 = scalar_lea.vmem %s2, 96
  %v913 = vld [vmem:[%s912] sm:$0xff]
  %v914 = vld [vmem:[%s912 + $0x8] sm:$0xff]
  %v915 = vld [vmem:[%s912 + $0x10] sm:$0xff]
  %v916 = vld [vmem:[%s912 + $0x18] sm:$0xff]
  %v918 = vsel %vm37, %v874, 0
  %v921 = vsel %vm37, %v879, 0
  %v924 = vsel %vm37, %v884, 0
  %v927 = vsel %vm37, %v889, 0
  %v930 = vsel %vm37, %v894, 0
  %v933 = vsel %vm37, %v899, 0
  %v936 = vsel %vm37, %v904, 0
  %v939 = vsel %vm37, %v909, 0
  %941 = vmatprep.subr.mxu0 0.0
  %942 = vmatpush1.msra.mxu0 0.0
  %943 = vmatprep.subr.mxu0 0.0
  %944 = vmatpush1.msra.mxu0 0.0
  %945 = vmatprep.subr.mxu0 0.0
  %946 = vmatpush1.msra.mxu0 0.0
  %947 = vmatprep.subr.mxu0 0.0
  %948 = vmatpush1.msra.mxu0 0.0
  %949 = vmatprep.subr.mxu0 0.0
  %950 = vmatpush1.msra.mxu0 0.0
  %951 = vmatprep.subr.mxu0 0.0
  %952 = vmatpush1.msra.mxu0 0.0
  %953 = vmatprep.subr.mxu0 0.0
  %954 = vmatpush1.msra.mxu0 0.0
  %955 = vmatprep.subr.mxu0 0.0
  %956 = vmatpush1.msra.mxu0 0.0
  %957 = vmatprep.subr.mxu0 0.0
  %958 = vmatpush1.msra.mxu0 0.0
  %959 = vmatprep.subr.mxu0 0.0
  %960 = vmatpush1.msra.mxu0 0.0
  %961 = vmatprep.subr.mxu0 0.0
  %962 = vmatpush1.msra.mxu0 0.0
  %963 = vmatprep.subr.mxu0 0.0
  %964 = vmatpush1.msra.mxu0 0.0
  %965 = vmatprep.subr.mxu0 0.0
  %966 = vmatpush1.msra.mxu0 %v916
  %967 = vmatprep.subr.mxu0 0.0
  %968 = vmatpush1.msra.mxu0 %v915
  %969 = vmatprep.subr.mxu0 0.0
  %970 = vmatpush1.msra.mxu0 %v914
  %971 = vmatprep.subr.mxu0 0.0
  %972 = vmatpush1.msra.mxu0 %v913
  %973 = vmatprep.subr.mxu0 0.0
  %974 = vmatpush2.msra.mxu0 0.0
  %975 = vmatprep.subr.mxu0 0.0
  %976 = vmatpush2.msra.mxu0 0.0
  %977 = vmatprep.subr.mxu0 0.0
  %978 = vmatpush2.msra.mxu0 0.0
  %979 = vmatprep.subr.mxu0 0.0
  %980 = vmatpush2.msra.mxu0 0.0
  %981 = vmatprep.subr.mxu0 0.0
  %982 = vmatpush2.msra.mxu0 0.0
  %983 = vmatprep.subr.mxu0 0.0
  %984 = vmatpush2.msra.mxu0 0.0
  %985 = vmatprep.subr.mxu0 0.0
  %986 = vmatpush2.msra.mxu0 0.0
  %987 = vmatprep.subr.mxu0 0.0
  %988 = vmatpush2.msra.mxu0 0.0
  %989 = vmatprep.subr.mxu0 0.0
  %990 = vmatpush2.msra.mxu0 0.0
  %991 = vmatprep.subr.mxu0 0.0
  %992 = vmatpush2.msra.mxu0 0.0
  %993 = vmatprep.subr.mxu0 0.0
  %994 = vmatpush2.msra.mxu0 0.0
  %995 = vmatprep.subr.mxu0 0.0
  %996 = vmatpush2.msra.mxu0 0.0
  %997 = vmatprep.subr.mxu0 0.0
  %998 = vmatpush2.msra.mxu0 0.0
  %999 = vmatprep.subr.mxu0 0.0
  %1000 = vmatpush2.msra.mxu0 0.0
  %1001 = vmatprep.subr.mxu0 0.0
  %1002 = vmatpush2.msra.mxu0 0.0
  %1003 = vmatprep.subr.mxu0 0.0
  %1004 = vmatpush2.msra.mxu0 0.0
  %1005 = vmatprep.mubr.f32.mxu0 0.0
  %1006 = vmatmul.mubr.f32.gmra.mxu0 %v918
  %v1007 = vpop.f32.mrf.mxu0
  %v1008 = vadd.f32 0.0, %v1007
  %v1009 = vpop.f32.mrf.mxu0
  %1010 = vmatprep.mubr.f32.mxu0 0.0
  %1011 = vmatmul.mubr.f32.gmra.mxu0 %v921
  %v1012 = vpop.f32.mrf.mxu0
  %v1013 = vadd.f32 0.0, %v1012
  %v1014 = vpop.f32.mrf.mxu0
  %1015 = vmatprep.mubr.f32.mxu0 0.0
  %1016 = vmatmul.mubr.f32.gmra.mxu0 %v924
  %v1017 = vpop.f32.mrf.mxu0
  %v1018 = vadd.f32 0.0, %v1017
  %v1019 = vpop.f32.mrf.mxu0
  %1020 = vmatprep.mubr.f32.mxu0 0.0
  %1021 = vmatmul.mubr.f32.gmra.mxu0 %v927
  %v1022 = vpop.f32.mrf.mxu0
  %v1023 = vadd.f32 0.0, %v1022
  %v1024 = vpop.f32.mrf.mxu0
  %1025 = vmatprep.mubr.f32.mxu0 0.0
  %1026 = vmatmul.mubr.f32.gmra.mxu0 %v930
  %v1027 = vpop.f32.mrf.mxu0
  %v1028 = vadd.f32 0.0, %v1027
  %v1029 = vpop.f32.mrf.mxu0
  %1030 = vmatprep.mubr.f32.mxu0 0.0
  %1031 = vmatmul.mubr.f32.gmra.mxu0 %v933
  %v1032 = vpop.f32.mrf.mxu0
  %v1033 = vadd.f32 0.0, %v1032
  %v1034 = vpop.f32.mrf.mxu0
  %1035 = vmatprep.mubr.f32.mxu0 0.0
  %1036 = vmatmul.mubr.f32.gmra.mxu0 %v936
  %v1037 = vpop.f32.mrf.mxu0
  %v1038 = vadd.f32 0.0, %v1037
  %v1039 = vpop.f32.mrf.mxu0
  %1040 = vmatprep.mubr.f32.mxu0 0.0
  %1041 = vmatmul.mubr.f32.gmra.mxu0 %v939
  %v1042 = vpop.f32.mrf.mxu0
  %v1043 = vadd.f32 0.0, %v1042
  %v1044 = vpop.f32.mrf.mxu0
  %1045 = vdwg.mxu0
  %v1046 = vmax.f32 %v1008, 0.0
  %v1047 = vmax.f32 %v1013, 0.0
  %v1048 = vmax.f32 %v1018, 0.0
  %v1049 = vmax.f32 %v1023, 0.0
  %v1050 = vmax.f32 %v1028, 0.0
  %v1051 = vmax.f32 %v1033, 0.0
  %v1052 = vmax.f32 %v1038, 0.0
  %v1053 = vmax.f32 %v1043, 0.0
  %1054 = vmatprep.subr.mxu0 0.0
  %1055 = vmatpush1.msra.mxu0 0.0
  %1056 = vmatprep.subr.mxu0 0.0
  %1057 = vmatpush1.msra.mxu0 0.0
  %1058 = vmatprep.subr.mxu0 0.0
  %1059 = vmatpush1.msra.mxu0 0.0
  %1060 = vmatprep.subr.mxu0 0.0
  %1061 = vmatpush1.msra.mxu0 0.0
  %1062 = vmatprep.subr.mxu0 0.0
  %1063 = vmatpush1.msra.mxu0 0.0
  %1064 = vmatprep.subr.mxu0 0.0
  %1065 = vmatpush1.msra.mxu0 0.0
  %1066 = vmatprep.subr.mxu0 0.0
  %1067 = vmatpush1.msra.mxu0 0.0
  %1068 = vmatprep.subr.mxu0 0.0
  %1069 = vmatpush1.msra.mxu0 0.0
  %1070 = vmatprep.subr.mxu0 0.0
  %1071 = vmatpush1.msra.mxu0 %v1053
  %1072 = vmatprep.subr.mxu0 0.0
  %1073 = vmatpush1.msra.mxu0 %v1052
  %1074 = vmatprep.subr.mxu0 0.0
  %1075 = vmatpush1.msra.mxu0 %v1051
  %1076 = vmatprep.subr.mxu0 0.0
  %1077 = vmatpush1.msra.mxu0 %v1050
  %1078 = vmatprep.subr.mxu0 0.0
  %1079 = vmatpush1.msra.mxu0 %v1049
  %1080 = vmatprep.subr.mxu0 0.0
  %1081 = vmatpush1.msra.mxu0 %v1048
  %1082 = vmatprep.subr.mxu0 0.0
  %1083 = vmatpush1.msra.mxu0 %v1047
  %1084 = vmatprep.subr.mxu0 0.0
  %1085 = vmatpush1.msra.mxu0 %v1046
  %1086 = vmatprep.subr.mxu0 0.0
  %1087 = vmatpush2.msra.mxu0 0.0
  %1088 = vmatprep.subr.mxu0 0.0
  %1089 = vmatpush2.msra.mxu0 0.0
  %1090 = vmatprep.subr.mxu0 0.0
  %1091 = vmatpush2.msra.mxu0 0.0
  %1092 = vmatprep.subr.mxu0 0.0
  %1093 = vmatpush2.msra.mxu0 0.0
  %1094 = vmatprep.subr.mxu0 0.0
  %1095 = vmatpush2.msra.mxu0 0.0
  %1096 = vmatprep.subr.mxu0 0.0
  %1097 = vmatpush2.msra.mxu0 0.0
  %1098 = vmatprep.subr.mxu0 0.0
  %1099 = vmatpush2.msra.mxu0 0.0
  %1100 = vmatprep.subr.mxu0 0.0
  %1101 = vmatpush2.msra.mxu0 0.0
  %1102 = vmatprep.subr.mxu0 0.0
  %1103 = vmatpush2.msra.mxu0 0.0
  %1104 = vmatprep.subr.mxu0 0.0
  %1105 = vmatpush2.msra.mxu0 0.0
  %1106 = vmatprep.subr.mxu0 0.0
  %1107 = vmatpush2.msra.mxu0 0.0
  %1108 = vmatprep.subr.mxu0 0.0
  %1109 = vmatpush2.msra.mxu0 0.0
  %1110 = vmatprep.subr.mxu0 0.0
  %1111 = vmatpush2.msra.mxu0 0.0
  %1112 = vmatprep.subr.mxu0 0.0
  %1113 = vmatpush2.msra.mxu0 0.0
  %1114 = vmatprep.subr.mxu0 0.0
  %1115 = vmatpush2.msra.mxu0 0.0
  %1116 = vmatprep.subr.mxu0 0.0
  %1117 = vmatpush2.msra.mxu0 0.0
  %1118 = vmatprep.mubr.f32.mxu0 0.0
  %1119 = vmatmul.mubr.f32.gmra.mxu0 %v177
  %v1120 = vpop.f32.mrf.mxu0
  %v1121 = vadd.f32 0.0, %v1120
  %v1122 = vpop.f32.mrf.mxu0
  %1123 = vmatprep.mubr.f32.mxu0 0.0
  %1124 = vmatmul.mubr.f32.gmra.mxu0 %v180
  %v1125 = vpop.f32.mrf.mxu0
  %v1126 = vadd.f32 0.0, %v1125
  %v1127 = vpop.f32.mrf.mxu0
  %1128 = vmatprep.mubr.f32.mxu0 0.0
  %1129 = vmatmul.mubr.f32.gmra.mxu0 %v183
  %v1130 = vpop.f32.mrf.mxu0
  %v1131 = vadd.f32 0.0, %v1130
  %v1132 = vpop.f32.mrf.mxu0
  %1133 = vmatprep.mubr.f32.mxu0 0.0
  %1134 = vmatmul.mubr.f32.gmra.mxu0 %v186
  %v1135 = vpop.f32.mrf.mxu0
  %v1136 = vadd.f32 0.0, %v1135
  %v1137 = vpop.f32.mrf.mxu0
  %1138 = vmatprep.mubr.f32.mxu0 0.0
  %1139 = vmatmul.mubr.f32.gmra.mxu0 %v189
  %v1140 = vpop.f32.mrf.mxu0
  %v1141 = vadd.f32 0.0, %v1140
  %v1142 = vpop.f32.mrf.mxu0
  %1143 = vmatprep.mubr.f32.mxu0 0.0
  %1144 = vmatmul.mubr.f32.gmra.mxu0 %v192
  %v1145 = vpop.f32.mrf.mxu0
  %v1146 = vadd.f32 0.0, %v1145
  %v1147 = vpop.f32.mrf.mxu0
  %1148 = vmatprep.mubr.f32.mxu0 0.0
  %1149 = vmatmul.mubr.f32.gmra.mxu0 %v195
  %v1150 = vpop.f32.mrf.mxu0
  %v1151 = vadd.f32 0.0, %v1150
  %v1152 = vpop.f32.mrf.mxu0
  %1153 = vmatprep.mubr.f32.mxu0 0.0
  %1154 = vmatmul.mubr.f32.gmra.mxu0 %v198
  %v1155 = vpop.f32.mrf.mxu0
  %v1156 = vadd.f32 0.0, %v1155
  %v1157 = vpop.f32.mrf.mxu0
  %1158 = vdwg.mxu0
  %1159 = vst.msk [vmem:[%s4] sm:$0xff] %vm37, %v1121
  %1160 = vst.msk [vmem:[%s4 + $0x8] sm:$0xff] %vm37, %v1126
  %1161 = vst.msk [vmem:[%s4 + $0x10] sm:$0xff] %vm37, %v1131
  %1162 = vst.msk [vmem:[%s4 + $0x18] sm:$0xff] %vm37, %v1136
  %1163 = vst.msk [vmem:[%s4 + $0x20] sm:$0xff] %vm37, %v1141
  %1164 = vst.msk [vmem:[%s4 + $0x28] sm:$0xff] %vm37, %v1146
  %1165 = vst.msk [vmem:[%s4 + $0x30] sm:$0xff] %vm37, %v1151
  %1166 = vst.msk [vmem:[%s4 + $0x38] sm:$0xff] %vm37, %v1156
  // Predicated region
  $region18: #{node_prediction_gcn_forward.1} parent=0 // pred_check
    _
  $region19: #{node_prediction_gcn_forward.1} parent=0 // pred_check_branch
    %1168 = sbr.rel (0) target = $region21
  $region20: #{node_prediction_gcn_forward.1} parent=0 // pred_region
    _
  $region21: #{node_prediction_gcn_forward.1} parent=0 // pred_fallthru
    _
  // Predicated region
  $region22: #{node_prediction_gcn_forward.1} parent=0 // pred_check
    _
  $region23: #{node_prediction_gcn_forward.1} parent=0 // pred_check_branch
    %1170 = sbr.rel (0) target = $region25
  $region24: #{node_prediction_gcn_forward.1} parent=0 // pred_region
    _
  $region25: #{node_prediction_gcn_forward.1} parent=0 // pred_fallthru
    _

</llo_original>
